<compile_context>
chip_gen: v5e
topology: v5e:2x2
jax: 0.10.0
libtpu: 0.0.40
codegen_flags: <defaults>
</compile_context>

<pallas_src>
import functools

import jax
import jax.numpy as jnp
from jax import lax
from jax.experimental import pallas as pl
from jax.experimental.pallas import tpu as pltpu


def _round_up(x, m):
    return (x + m - 1) // m * m


def _fused_minimal_rnn_kernel(
    x_ref, wt_ref, bin_ref, vt_ref, b_ref, h0_ref, w_hbm_ref,   # inputs
    out_ref,                                                    # output
    h_scratch, w_scratch, z_scratch, zv_scratch, w_sem,         # scratch
):
    """One time-block: parallel prologue (z, zv) + serial MinimalRNN recurrence."""
    tb = pl.program_id(0)
    t_blk, Bp, I = x_ref.shape          # static
    Hp = out_ref.shape[-1]              # static

    # --- one-time setup at the first time block ---------------------------
    @pl.when(tb == 0)
    def _():
        # Single-buffered recurrent weight W^T: start the DMA now and hide it
        # behind the prologue matmuls below (which do not need W).
        pltpu.make_async_copy(w_hbm_ref, w_scratch, w_sem).start()
        h_scratch[...] = h0_ref[...]

    # --- parallel (non-serial) prologue for this block ---------------------
    #   z  = tanh(x @ W_in^T + b_in)
    #   zv = z @ V^T + b        (bias folded off the serial path)
    x2d = x_ref[...].reshape(t_blk * Bp, I)
    z2d = jnp.tanh(
        jnp.dot(x2d, wt_ref[...], preferred_element_type=jnp.float32) + bin_ref[...]
    )
    zv2d = jnp.dot(z2d, vt_ref[...], preferred_element_type=jnp.float32) + b_ref[...]
    z_scratch[...] = z2d.reshape(t_blk, Bp, Hp)
    zv_scratch[...] = zv2d.reshape(t_blk, Bp, Hp)

    @pl.when(tb == 0)
    def _():
        pltpu.make_async_copy(w_hbm_ref, w_scratch, w_sem).wait()

    w_t = w_scratch[...]                # (Hp, Hp), resident f32

    # --- serial recurrence: e = h @ W^T + zv_t ; h = z_t + u * (h - z_t) ---
    def step(i, h):
        z_t = z_scratch[i]                                           # (Bp, Hp)
        e = jnp.dot(h, w_t, preferred_element_type=jnp.float32) + zv_scratch[i]
        u = jax.nn.sigmoid(e)
        h_new = z_t + u * (h - z_t)                                  # == u*h + (1-u)*z
        out_ref[:, i, :] = h_new.astype(out_ref.dtype)               # batch-major store
        return h_new

    unroll = next(u for u in (8, 4, 2, 1) if t_blk % u == 0)
    h_last = lax.fori_loop(0, t_blk, step, h_scratch[...], unroll=unroll)
    h_scratch[...] = h_last


@functools.partial(jax.jit, static_argnames=("t_blk",))
def minimal_rnn_forward(x, w_in, b_in, W, V, b, h0=None, *, t_blk=32):
    """x: (batch, seq_len, input_size) -> (outputs (B,S,H), h_final (B,H))."""
    B, S, I = x.shape
    H = W.shape[0]
    dtype = x.dtype
    f32 = jnp.float32

    Bp = _round_up(B, 8)          # sublane granule
    Hp = _round_up(H, 128)        # lane granule -> unmasked, lane-dense stores
    # Time-block: the whole sequence if it is short, otherwise a multiple of 8
    # (keeps the (8,128) block-shape constraint satisfied for multi-block grids).
    if S <= t_blk:
        t_eff = S
    else:
        t_eff = _round_up(min(t_blk, S), 8)
    Sp = _round_up(S, t_eff)
    n_blk = Sp // t_eff

    # ---- wrapper-side weight preprocessing (once, off the serial path) ----
    wt = jnp.zeros((I, Hp), f32).at[:, :H].set(w_in.astype(f32).T)      # W_in^T
    bin_p = jnp.zeros((1, Hp), f32).at[:, :H].set(b_in.astype(f32)[None, :])
    vt = jnp.zeros((Hp, Hp), f32).at[:H, :H].set(V.astype(f32).T)       # V^T
    w_t = jnp.zeros((Hp, Hp), f32).at[:H, :H].set(W.astype(f32).T)      # W^T
    b_p = jnp.zeros((1, Hp), f32).at[:, :H].set(b.astype(f32)[None, :])
    if h0 is None:
        h0_p = jnp.zeros((Bp, Hp), f32)
    else:
        h0_p = jnp.zeros((Bp, Hp), f32).at[:B, :H].set(h0.astype(f32))

    # ---- time-major, zero-padded input (x is small: I << Hp) ----
    x_tm = jnp.transpose(x, (1, 0, 2)).astype(f32)                  # (S, B, I)
    x_tm = jnp.pad(x_tm, ((0, Sp - S), (0, Bp - B), (0, 0)))        # (Sp, Bp, I)

    # ---- explicit VMEM budget (default scoped limit is well below physical) ----
    f32b = 4
    out_b = max(jnp.dtype(dtype).itemsize, f32b)
    vmem_needed = (
        2 * t_eff * Bp * I * f32b                              # x blocks (dbl-buf)
        + 2 * Bp * t_eff * Hp * out_b                          # out blocks (dbl-buf)
        + 2 * (I * Hp + Hp + Hp * Hp + Hp + Bp * Hp) * f32b    # wt, b_in, V^T, b, h0
        + (Bp * Hp + Hp * Hp + 2 * t_eff * Bp * Hp) * f32b     # h, W^T, z, zv scratch
    )
    vmem_limit = int(min(2 * vmem_needed + (8 << 20), 48 << 20))

    out = pl.pallas_call(
        _fused_minimal_rnn_kernel,
        out_shape=jax.ShapeDtypeStruct((Bp, Sp, Hp), dtype),
        grid_spec=pltpu.PrefetchScalarGridSpec(
            num_scalar_prefetch=0,
            grid=(n_blk,),
            in_specs=[
                pl.BlockSpec((t_eff, Bp, I), lambda t: (t, 0, 0)),   # x block
                pl.BlockSpec((I, Hp), lambda t: (0, 0)),             # W_in^T
                pl.BlockSpec((1, Hp), lambda t: (0, 0)),             # b_in
                pl.BlockSpec((Hp, Hp), lambda t: (0, 0)),            # V^T
                pl.BlockSpec((1, Hp), lambda t: (0, 0)),             # b
                pl.BlockSpec((Bp, Hp), lambda t: (0, 0)),            # h0
                pl.BlockSpec(memory_space=pl.ANY),                   # W^T (raw HBM)
            ],
            out_specs=pl.BlockSpec((Bp, t_eff, Hp), lambda t: (0, t, 0)),
            scratch_shapes=[
                pltpu.VMEM((Bp, Hp), jnp.float32),          # persistent hidden state
                pltpu.VMEM((Hp, Hp), jnp.float32),          # single-buffered W^T
                pltpu.VMEM((t_eff, Bp, Hp), jnp.float32),   # z block
                pltpu.VMEM((t_eff, Bp, Hp), jnp.float32),   # zv block (z@V^T + b)
                pltpu.SemaphoreType.DMA(()),                # W^T fetch semaphore
            ],
        ),
        compiler_params=pltpu.CompilerParams(
            dimension_semantics=("arbitrary",),             # sequential recurrence
            vmem_limit_bytes=vmem_limit,
        ),
    )(x_tm, wt, bin_p, vt, b_p, h0_p, w_t)

    outputs = out[:B, :S, :H]          # already batch-major: no transpose needed
    h_final = outputs[:, -1]
    return outputs, h_final


def init_params(key, input_size, hidden_size,
                sigma_w=6.88, sigma_v=1.39, mu_b=0.0):
    """Deterministic critical initialization (mirrors _critical_initialization)."""
    k_w, k_v, k_in = jax.random.split(key, 3)
    W = jax.random.normal(k_w, (hidden_size, hidden_size), jnp.float32) * (
        sigma_w / jnp.sqrt(float(hidden_size)))
    V = jax.random.normal(k_v, (hidden_size, hidden_size), jnp.float32) * (
        sigma_v / jnp.sqrt(float(hidden_size)))
    b = jnp.full((hidden_size,), mu_b, jnp.float32)
    w_in = jax.nn.initializers.orthogonal()(k_in, (hidden_size, input_size), jnp.float32)
    b_in = jnp.zeros((hidden_size,), jnp.float32)
    return w_in, b_in, W, V, b


def reference_forward(x, w_in, b_in, W, V, b):
    """Pure-JAX reference mirroring the PyTorch forward (sanity check)."""
    B, S, _ = x.shape
    H = W.shape[0]
    h = jnp.zeros((B, H), x.dtype)
    outs = []
    for t in range(S):
        z = jnp.tanh(x[:, t] @ w_in.T + b_in)
        e = h @ W.T + z @ V.T + b
        u = jax.nn.sigmoid(e)
        h = u * h + (1.0 - u) * z
        outs.append(h)
    return jnp.stack(outs, axis=1), h


if __name__ == "__main__":
    batch, seq_len, input_size, hidden_size = 2, 8, 16, 32

    key = jax.random.PRNGKey(0)
    k_params, k_x = jax.random.split(key)

    w_in, b_in, W, V, b = init_params(k_params, input_size, hidden_size)
    x = jax.random.normal(k_x, (batch, seq_len, input_size), jnp.float32)

    outputs, h_final = minimal_rnn_forward(x, w_in, b_in, W, V, b)
    jax.block_until_ready((outputs, h_final))

    ref_out, ref_h = reference_forward(x, w_in, b_in, W, V, b)
    assert outputs.shape == (batch, seq_len, hidden_size)
    assert h_final.shape == (batch, hidden_size)
    assert jnp.allclose(outputs, ref_out, atol=1e-4, rtol=1e-4)
    assert jnp.allclose(h_final, ref_h, atol=1e-4, rtol=1e-4)

    print("KERNEL_OK")
</pallas_src>

<mosaic_0001>
module attributes {stable_mosaic.version = 11 : i64} {
  func.func @_fused_minimal_rnn_kernel(%arg0: i32, %arg1: memref<8x8x16xf32, #tpu.memory_space<vmem>>, %arg2: memref<16x128xf32, #tpu.memory_space<vmem>>, %arg3: memref<1x128xf32, #tpu.memory_space<vmem>>, %arg4: memref<128x128xf32, #tpu.memory_space<vmem>>, %arg5: memref<1x128xf32, #tpu.memory_space<vmem>>, %arg6: memref<8x128xf32, #tpu.memory_space<vmem>>, %arg7: memref<128x128xf32, #tpu.memory_space<any>>, %arg8: memref<8x8x128xf32, #tpu.memory_space<vmem>>, %arg9: memref<8x128xf32, #tpu.memory_space<vmem>>, %arg10: memref<128x128xf32, #tpu.memory_space<vmem>>, %arg11: memref<8x8x128xf32, #tpu.memory_space<vmem>>, %arg12: memref<8x8x128xf32, #tpu.memory_space<vmem>>, %arg13: memref<!tpu.dma_semaphore, #tpu.memory_space<semaphore_mem>>) attributes {dimension_semantics = [#tpu.dimension_semantics<arbitrary>], iteration_bounds = array<i64: 1>, scalar_prefetch = 0 : i64, scratch_operands = 5 : i64, tpu.core_type = #tpu.core_type<tc>, window_params = [{transform_indices = @transform_0, window_bounds = array<i64: 8, 8, 16>}, {pipeline_mode = #tpu.pipeline_mode<synchronous>, transform_indices = @transform_1, window_bounds = array<i64: 16, 128>}, {pipeline_mode = #tpu.pipeline_mode<synchronous>, transform_indices = @transform_2, window_bounds = array<i64: 1, 128>}, {pipeline_mode = #tpu.pipeline_mode<synchronous>, transform_indices = @transform_3, window_bounds = array<i64: 128, 128>}, {pipeline_mode = #tpu.pipeline_mode<synchronous>, transform_indices = @transform_4, window_bounds = array<i64: 1, 128>}, {pipeline_mode = #tpu.pipeline_mode<synchronous>, transform_indices = @transform_5, window_bounds = array<i64: 8, 128>}, {}, {transform_indices = @transform_7, window_bounds = array<i64: 8, 8, 128>}]} {
    %c0_i32 = arith.constant 0 : i32
    %0 = arith.cmpi eq, %arg0, %c0_i32 : i32
    %1 = arith.extui %0 : i1 to i32
    %c0_i32_0 = arith.constant 0 : i32
    %2 = arith.cmpi ne, %1, %c0_i32_0 : i32
    scf.if %2 {
      tpu.enqueue_dma source(%arg7 : memref<128x128xf32, #tpu.memory_space<any>>) target(%arg10 : memref<128x128xf32, #tpu.memory_space<vmem>>) target_semaphore(%arg13 : memref<!tpu.dma_semaphore, #tpu.memory_space<semaphore_mem>>)
      %c0_91 = arith.constant 0 : index
      %c0_92 = arith.constant 0 : index
      %186 = vector.load %arg6[%c0_91, %c0_92] : memref<8x128xf32, #tpu.memory_space<vmem>>, vector<8x128xf32>
      %c0_93 = arith.constant 0 : index
      %c0_94 = arith.constant 0 : index
      %187 = vector.load %arg9[%c0_93, %c0_94] : memref<8x128xf32, #tpu.memory_space<vmem>>, vector<8x128xf32>
      tpu.vector_store %arg9[%c0_93, %c0_94], %186 {strides = array<i32>} : memref<8x128xf32, #tpu.memory_space<vmem>>, vector<8x128xf32>,
    } else {
    }
    %c0 = arith.constant 0 : index
    %c0_1 = arith.constant 0 : index
    %c0_2 = arith.constant 0 : index
    %3 = vector.load %arg1[%c0, %c0_1, %c0_2] : memref<8x8x16xf32, #tpu.memory_space<vmem>>, vector<8x8x16xf32>
    %4 = vector.shape_cast %3 : vector<8x8x16xf32> to vector<64x16xf32>
    %c0_3 = arith.constant 0 : index
    %c0_4 = arith.constant 0 : index
    %5 = vector.load %arg2[%c0_3, %c0_4] : memref<16x128xf32, #tpu.memory_space<vmem>>, vector<16x128xf32>
    %cst = arith.constant dense<0.000000e+00> : vector<64x128xf32>
    %6 = tpu.matmul %4, %5, %cst {dimension_numbers = #tpu.dot_dimension_numbers<[1], [0], [0], [1], [0, 0, 1, 1], [], []>} : vector<64x16xf32>, vector<16x128xf32>, vector<64x128xf32> -> vector<64x128xf32>
    %c0_5 = arith.constant 0 : index
    %c0_6 = arith.constant 0 : index
    %7 = vector.load %arg3[%c0_5, %c0_6] : memref<1x128xf32, #tpu.memory_space<vmem>>, vector<1x128xf32>
    %8 = vector.broadcast %7 : vector<1x128xf32> to vector<64x128xf32>
    %9 = arith.addf %6, %8 : vector<64x128xf32>
    %10 = math.tanh %9 : vector<64x128xf32>
    %c0_7 = arith.constant 0 : index
    %c0_8 = arith.constant 0 : index
    %11 = vector.load %arg4[%c0_7, %c0_8] : memref<128x128xf32, #tpu.memory_space<vmem>>, vector<128x128xf32>
    %cst_9 = arith.constant dense<0.000000e+00> : vector<64x128xf32>
    %12 = tpu.matmul %10, %11, %cst_9 {dimension_numbers = #tpu.dot_dimension_numbers<[1], [0], [0], [1], [0, 0, 1, 1], [], []>} : vector<64x128xf32>, vector<128x128xf32>, vector<64x128xf32> -> vector<64x128xf32>
    %c0_10 = arith.constant 0 : index
    %c0_11 = arith.constant 0 : index
    %13 = vector.load %arg5[%c0_10, %c0_11] : memref<1x128xf32, #tpu.memory_space<vmem>>, vector<1x128xf32>
    %14 = vector.broadcast %13 : vector<1x128xf32> to vector<64x128xf32>
    %15 = arith.addf %12, %14 : vector<64x128xf32>
    %16 = vector.shape_cast %10 : vector<64x128xf32> to vector<8x8x128xf32>
    %c0_12 = arith.constant 0 : index
    %c0_13 = arith.constant 0 : index
    %c0_14 = arith.constant 0 : index
    %17 = vector.load %arg11[%c0_12, %c0_13, %c0_14] : memref<8x8x128xf32, #tpu.memory_space<vmem>>, vector<8x8x128xf32>
    tpu.vector_store %arg11[%c0_12, %c0_13, %c0_14], %16 {strides = array<i32>} : memref<8x8x128xf32, #tpu.memory_space<vmem>>, vector<8x8x128xf32>,
    %18 = vector.shape_cast %15 : vector<64x128xf32> to vector<8x8x128xf32>
    %c0_15 = arith.constant 0 : index
    %c0_16 = arith.constant 0 : index
    %c0_17 = arith.constant 0 : index
    %19 = vector.load %arg12[%c0_15, %c0_16, %c0_17] : memref<8x8x128xf32, #tpu.memory_space<vmem>>, vector<8x8x128xf32>
    tpu.vector_store %arg12[%c0_15, %c0_16, %c0_17], %18 {strides = array<i32>} : memref<8x8x128xf32, #tpu.memory_space<vmem>>, vector<8x8x128xf32>,
    %c0_i32_18 = arith.constant 0 : i32
    %20 = arith.cmpi eq, %arg0, %c0_i32_18 : i32
    %21 = arith.extui %20 : i1 to i32
    %c0_i32_19 = arith.constant 0 : i32
    %22 = arith.cmpi ne, %21, %c0_i32_19 : i32
    scf.if %22 {
      tpu.wait_dma2 semaphore(%arg13 : memref<!tpu.dma_semaphore, #tpu.memory_space<semaphore_mem>>) src(%arg7 : memref<128x128xf32, #tpu.memory_space<any>>) dst(%arg10 : memref<128x128xf32, #tpu.memory_space<vmem>>)
    } else {
    }
    %c0_20 = arith.constant 0 : index
    %c0_21 = arith.constant 0 : index
    %23 = vector.load %arg10[%c0_20, %c0_21] : memref<128x128xf32, #tpu.memory_space<vmem>>, vector<128x128xf32>
    %c0_22 = arith.constant 0 : index
    %c0_23 = arith.constant 0 : index
    %24 = vector.load %arg9[%c0_22, %c0_23] : memref<8x128xf32, #tpu.memory_space<vmem>>, vector<8x128xf32>
    %c0_i32_24 = arith.constant 0 : i32
    %25 = arith.index_cast %c0_i32_24 : i32 to index
    %c0_25 = arith.constant 0 : index
    %c0_26 = arith.constant 0 : index
    %26 = vector.load %arg11[%25, %c0_25, %c0_26] : memref<8x8x128xf32, #tpu.memory_space<vmem>>, vector<1x8x128xf32>
    %27 = vector.shape_cast %26 : vector<1x8x128xf32> to vector<8x128xf32>
    %cst_27 = arith.constant dense<0.000000e+00> : vector<8x128xf32>
    %28 = tpu.matmul %24, %23, %cst_27 {dimension_numbers = #tpu.dot_dimension_numbers<[1], [0], [0], [1], [0, 0, 1, 1], [], []>} : vector<8x128xf32>, vector<128x128xf32>, vector<8x128xf32> -> vector<8x128xf32>
    %29 = arith.index_cast %c0_i32_24 : i32 to index
    %c0_28 = arith.constant 0 : index
    %c0_29 = arith.constant 0 : index
    %30 = vector.load %arg12[%29, %c0_28, %c0_29] : memref<8x8x128xf32, #tpu.memory_space<vmem>>, vector<1x8x128xf32>
    %31 = vector.shape_cast %30 : vector<1x8x128xf32> to vector<8x128xf32>
    %32 = arith.addf %28, %31 : vector<8x128xf32>
    %33 = arith.negf %32 : vector<8x128xf32>
    %34 = math.exp %33 : vector<8x128xf32>
    %cst_30 = arith.constant 1.000000e+00 : f32
    %35 = vector.broadcast %cst_30 : f32 to vector<8x128xf32>
    %36 = arith.addf %35, %34 : vector<8x128xf32>
    %37 = arith.divf %35, %36 : vector<8x128xf32>
    %38 = arith.subf %24, %27 : vector<8x128xf32>
    %39 = arith.mulf %37, %38 : vector<8x128xf32>
    %40 = arith.addf %27, %39 : vector<8x128xf32>
    %c0_31 = arith.constant 0 : index
    %41 = arith.index_cast %c0_i32_24 : i32 to index
    %c0_32 = arith.constant 0 : index
    %42 = vector.load %arg8[%c0_31, %41, %c0_32] : memref<8x8x128xf32, #tpu.memory_space<vmem>>, vector<8x1x128xf32>
    %43 = vector.shape_cast %42 : vector<8x1x128xf32> to vector<8x128xf32>
    %44 = vector.shape_cast %40 : vector<8x128xf32> to vector<8x1x128xf32>
    tpu.vector_store %arg8[%c0_31, %41, %c0_32], %44 {strides = array<i32>} : memref<8x8x128xf32, #tpu.memory_space<vmem>>, vector<8x1x128xf32>,
    %c1_i32 = arith.constant 1 : i32
    %45 = arith.index_cast %c1_i32 : i32 to index
    %c0_33 = arith.constant 0 : index
    %c0_34 = arith.constant 0 : index
    %46 = vector.load %arg11[%45, %c0_33, %c0_34] : memref<8x8x128xf32, #tpu.memory_space<vmem>>, vector<1x8x128xf32>
    %47 = vector.shape_cast %46 : vector<1x8x128xf32> to vector<8x128xf32>
    %cst_35 = arith.constant dense<0.000000e+00> : vector<8x128xf32>
    %48 = tpu.matmul %40, %23, %cst_35 {dimension_numbers = #tpu.dot_dimension_numbers<[1], [0], [0], [1], [0, 0, 1, 1], [], []>} : vector<8x128xf32>, vector<128x128xf32>, vector<8x128xf32> -> vector<8x128xf32>
    %49 = arith.index_cast %c1_i32 : i32 to index
    %c0_36 = arith.constant 0 : index
    %c0_37 = arith.constant 0 : index
    %50 = vector.load %arg12[%49, %c0_36, %c0_37] : memref<8x8x128xf32, #tpu.memory_space<vmem>>, vector<1x8x128xf32>
    %51 = vector.shape_cast %50 : vector<1x8x128xf32> to vector<8x128xf32>
    %52 = arith.addf %48, %51 : vector<8x128xf32>
    %53 = arith.negf %52 : vector<8x128xf32>
    %54 = math.exp %53 : vector<8x128xf32>
    %cst_38 = arith.constant 1.000000e+00 : f32
    %55 = vector.broadcast %cst_38 : f32 to vector<8x128xf32>
    %56 = arith.addf %55, %54 : vector<8x128xf32>
    %57 = arith.divf %55, %56 : vector<8x128xf32>
    %58 = arith.subf %40, %47 : vector<8x128xf32>
    %59 = arith.mulf %57, %58 : vector<8x128xf32>
    %60 = arith.addf %47, %59 : vector<8x128xf32>
    %c0_39 = arith.constant 0 : index
    %61 = arith.index_cast %c1_i32 : i32 to index
    %c0_40 = arith.constant 0 : index
    %62 = vector.load %arg8[%c0_39, %61, %c0_40] : memref<8x8x128xf32, #tpu.memory_space<vmem>>, vector<8x1x128xf32>
    %63 = vector.shape_cast %62 : vector<8x1x128xf32> to vector<8x128xf32>
    %64 = vector.shape_cast %60 : vector<8x128xf32> to vector<8x1x128xf32>
    tpu.vector_store %arg8[%c0_39, %61, %c0_40], %64 {strides = array<i32>} : memref<8x8x128xf32, #tpu.memory_space<vmem>>, vector<8x1x128xf32>,
    %c2_i32 = arith.constant 2 : i32
    %65 = arith.index_cast %c2_i32 : i32 to index
    %c0_41 = arith.constant 0 : index
    %c0_42 = arith.constant 0 : index
    %66 = vector.load %arg11[%65, %c0_41, %c0_42] : memref<8x8x128xf32, #tpu.memory_space<vmem>>, vector<1x8x128xf32>
    %67 = vector.shape_cast %66 : vector<1x8x128xf32> to vector<8x128xf32>
    %cst_43 = arith.constant dense<0.000000e+00> : vector<8x128xf32>
    %68 = tpu.matmul %60, %23, %cst_43 {dimension_numbers = #tpu.dot_dimension_numbers<[1], [0], [0], [1], [0, 0, 1, 1], [], []>} : vector<8x128xf32>, vector<128x128xf32>, vector<8x128xf32> -> vector<8x128xf32>
    %69 = arith.index_cast %c2_i32 : i32 to index
    %c0_44 = arith.constant 0 : index
    %c0_45 = arith.constant 0 : index
    %70 = vector.load %arg12[%69, %c0_44, %c0_45] : memref<8x8x128xf32, #tpu.memory_space<vmem>>, vector<1x8x128xf32>
    %71 = vector.shape_cast %70 : vector<1x8x128xf32> to vector<8x128xf32>
    %72 = arith.addf %68, %71 : vector<8x128xf32>
    %73 = arith.negf %72 : vector<8x128xf32>
    %74 = math.exp %73 : vector<8x128xf32>
    %cst_46 = arith.constant 1.000000e+00 : f32
    %75 = vector.broadcast %cst_46 : f32 to vector<8x128xf32>
    %76 = arith.addf %75, %74 : vector<8x128xf32>
    %77 = arith.divf %75, %76 : vector<8x128xf32>
    %78 = arith.subf %60, %67 : vector<8x128xf32>
    %79 = arith.mulf %77, %78 : vector<8x128xf32>
    %80 = arith.addf %67, %79 : vector<8x128xf32>
    %c0_47 = arith.constant 0 : index
    %81 = arith.index_cast %c2_i32 : i32 to index
    %c0_48 = arith.constant 0 : index
    %82 = vector.load %arg8[%c0_47, %81, %c0_48] : memref<8x8x128xf32, #tpu.memory_space<vmem>>, vector<8x1x128xf32>
    %83 = vector.shape_cast %82 : vector<8x1x128xf32> to vector<8x128xf32>
    %84 = vector.shape_cast %80 : vector<8x128xf32> to vector<8x1x128xf32>
    tpu.vector_store %arg8[%c0_47, %81, %c0_48], %84 {strides = array<i32>} : memref<8x8x128xf32, #tpu.memory_space<vmem>>, vector<8x1x128xf32>,
    %c3_i32 = arith.constant 3 : i32
    %85 = arith.index_cast %c3_i32 : i32 to index
    %c0_49 = arith.constant 0 : index
    %c0_50 = arith.constant 0 : index
    %86 = vector.load %arg11[%85, %c0_49, %c0_50] : memref<8x8x128xf32, #tpu.memory_space<vmem>>, vector<1x8x128xf32>
    %87 = vector.shape_cast %86 : vector<1x8x128xf32> to vector<8x128xf32>
    %cst_51 = arith.constant dense<0.000000e+00> : vector<8x128xf32>
    %88 = tpu.matmul %80, %23, %cst_51 {dimension_numbers = #tpu.dot_dimension_numbers<[1], [0], [0], [1], [0, 0, 1, 1], [], []>} : vector<8x128xf32>, vector<128x128xf32>, vector<8x128xf32> -> vector<8x128xf32>
    %89 = arith.index_cast %c3_i32 : i32 to index
    %c0_52 = arith.constant 0 : index
    %c0_53 = arith.constant 0 : index
    %90 = vector.load %arg12[%89, %c0_52, %c0_53] : memref<8x8x128xf32, #tpu.memory_space<vmem>>, vector<1x8x128xf32>
    %91 = vector.shape_cast %90 : vector<1x8x128xf32> to vector<8x128xf32>
    %92 = arith.addf %88, %91 : vector<8x128xf32>
    %93 = arith.negf %92 : vector<8x128xf32>
    %94 = math.exp %93 : vector<8x128xf32>
    %cst_54 = arith.constant 1.000000e+00 : f32
    %95 = vector.broadcast %cst_54 : f32 to vector<8x128xf32>
    %96 = arith.addf %95, %94 : vector<8x128xf32>
    %97 = arith.divf %95, %96 : vector<8x128xf32>
    %98 = arith.subf %80, %87 : vector<8x128xf32>
    %99 = arith.mulf %97, %98 : vector<8x128xf32>
    %100 = arith.addf %87, %99 : vector<8x128xf32>
    %c0_55 = arith.constant 0 : index
    %101 = arith.index_cast %c3_i32 : i32 to index
    %c0_56 = arith.constant 0 : index
    %102 = vector.load %arg8[%c0_55, %101, %c0_56] : memref<8x8x128xf32, #tpu.memory_space<vmem>>, vector<8x1x128xf32>
    %103 = vector.shape_cast %102 : vector<8x1x128xf32> to vector<8x128xf32>
    %104 = vector.shape_cast %100 : vector<8x128xf32> to vector<8x1x128xf32>
    tpu.vector_store %arg8[%c0_55, %101, %c0_56], %104 {strides = array<i32>} : memref<8x8x128xf32, #tpu.memory_space<vmem>>, vector<8x1x128xf32>,
    %c4_i32 = arith.constant 4 : i32
    %105 = arith.index_cast %c4_i32 : i32 to index
    %c0_57 = arith.constant 0 : index
    %c0_58 = arith.constant 0 : index
    %106 = vector.load %arg11[%105, %c0_57, %c0_58] : memref<8x8x128xf32, #tpu.memory_space<vmem>>, vector<1x8x128xf32>
    %107 = vector.shape_cast %106 : vector<1x8x128xf32> to vector<8x128xf32>
    %cst_59 = arith.constant dense<0.000000e+00> : vector<8x128xf32>
    %108 = tpu.matmul %100, %23, %cst_59 {dimension_numbers = #tpu.dot_dimension_numbers<[1], [0], [0], [1], [0, 0, 1, 1], [], []>} : vector<8x128xf32>, vector<128x128xf32>, vector<8x128xf32> -> vector<8x128xf32>
    %109 = arith.index_cast %c4_i32 : i32 to index
    %c0_60 = arith.constant 0 : index
    %c0_61 = arith.constant 0 : index
    %110 = vector.load %arg12[%109, %c0_60, %c0_61] : memref<8x8x128xf32, #tpu.memory_space<vmem>>, vector<1x8x128xf32>
    %111 = vector.shape_cast %110 : vector<1x8x128xf32> to vector<8x128xf32>
    %112 = arith.addf %108, %111 : vector<8x128xf32>
    %113 = arith.negf %112 : vector<8x128xf32>
    %114 = math.exp %113 : vector<8x128xf32>
    %cst_62 = arith.constant 1.000000e+00 : f32
    %115 = vector.broadcast %cst_62 : f32 to vector<8x128xf32>
    %116 = arith.addf %115, %114 : vector<8x128xf32>
    %117 = arith.divf %115, %116 : vector<8x128xf32>
    %118 = arith.subf %100, %107 : vector<8x128xf32>
    %119 = arith.mulf %117, %118 : vector<8x128xf32>
    %120 = arith.addf %107, %119 : vector<8x128xf32>
    %c0_63 = arith.constant 0 : index
    %121 = arith.index_cast %c4_i32 : i32 to index
    %c0_64 = arith.constant 0 : index
    %122 = vector.load %arg8[%c0_63, %121, %c0_64] : memref<8x8x128xf32, #tpu.memory_space<vmem>>, vector<8x1x128xf32>
    %123 = vector.shape_cast %122 : vector<8x1x128xf32> to vector<8x128xf32>
    %124 = vector.shape_cast %120 : vector<8x128xf32> to vector<8x1x128xf32>
    tpu.vector_store %arg8[%c0_63, %121, %c0_64], %124 {strides = array<i32>} : memref<8x8x128xf32, #tpu.memory_space<vmem>>, vector<8x1x128xf32>,
    %c5_i32 = arith.constant 5 : i32
    %125 = arith.index_cast %c5_i32 : i32 to index
    %c0_65 = arith.constant 0 : index
    %c0_66 = arith.constant 0 : index
    %126 = vector.load %arg11[%125, %c0_65, %c0_66] : memref<8x8x128xf32, #tpu.memory_space<vmem>>, vector<1x8x128xf32>
    %127 = vector.shape_cast %126 : vector<1x8x128xf32> to vector<8x128xf32>
    %cst_67 = arith.constant dense<0.000000e+00> : vector<8x128xf32>
    %128 = tpu.matmul %120, %23, %cst_67 {dimension_numbers = #tpu.dot_dimension_numbers<[1], [0], [0], [1], [0, 0, 1, 1], [], []>} : vector<8x128xf32>, vector<128x128xf32>, vector<8x128xf32> -> vector<8x128xf32>
    %129 = arith.index_cast %c5_i32 : i32 to index
    %c0_68 = arith.constant 0 : index
    %c0_69 = arith.constant 0 : index
    %130 = vector.load %arg12[%129, %c0_68, %c0_69] : memref<8x8x128xf32, #tpu.memory_space<vmem>>, vector<1x8x128xf32>
    %131 = vector.shape_cast %130 : vector<1x8x128xf32> to vector<8x128xf32>
    %132 = arith.addf %128, %131 : vector<8x128xf32>
    %133 = arith.negf %132 : vector<8x128xf32>
    %134 = math.exp %133 : vector<8x128xf32>
    %cst_70 = arith.constant 1.000000e+00 : f32
    %135 = vector.broadcast %cst_70 : f32 to vector<8x128xf32>
    %136 = arith.addf %135, %134 : vector<8x128xf32>
    %137 = arith.divf %135, %136 : vector<8x128xf32>
    %138 = arith.subf %120, %127 : vector<8x128xf32>
    %139 = arith.mulf %137, %138 : vector<8x128xf32>
    %140 = arith.addf %127, %139 : vector<8x128xf32>
    %c0_71 = arith.constant 0 : index
    %141 = arith.index_cast %c5_i32 : i32 to index
    %c0_72 = arith.constant 0 : index
    %142 = vector.load %arg8[%c0_71, %141, %c0_72] : memref<8x8x128xf32, #tpu.memory_space<vmem>>, vector<8x1x128xf32>
    %143 = vector.shape_cast %142 : vector<8x1x128xf32> to vector<8x128xf32>
    %144 = vector.shape_cast %140 : vector<8x128xf32> to vector<8x1x128xf32>
    tpu.vector_store %arg8[%c0_71, %141, %c0_72], %144 {strides = array<i32>} : memref<8x8x128xf32, #tpu.memory_space<vmem>>, vector<8x1x128xf32>,
    %c6_i32 = arith.constant 6 : i32
    %145 = arith.index_cast %c6_i32 : i32 to index
    %c0_73 = arith.constant 0 : index
    %c0_74 = arith.constant 0 : index
    %146 = vector.load %arg11[%145, %c0_73, %c0_74] : memref<8x8x128xf32, #tpu.memory_space<vmem>>, vector<1x8x128xf32>
    %147 = vector.shape_cast %146 : vector<1x8x128xf32> to vector<8x128xf32>
    %cst_75 = arith.constant dense<0.000000e+00> : vector<8x128xf32>
    %148 = tpu.matmul %140, %23, %cst_75 {dimension_numbers = #tpu.dot_dimension_numbers<[1], [0], [0], [1], [0, 0, 1, 1], [], []>} : vector<8x128xf32>, vector<128x128xf32>, vector<8x128xf32> -> vector<8x128xf32>
    %149 = arith.index_cast %c6_i32 : i32 to index
    %c0_76 = arith.constant 0 : index
    %c0_77 = arith.constant 0 : index
    %150 = vector.load %arg12[%149, %c0_76, %c0_77] : memref<8x8x128xf32, #tpu.memory_space<vmem>>, vector<1x8x128xf32>
    %151 = vector.shape_cast %150 : vector<1x8x128xf32> to vector<8x128xf32>
    %152 = arith.addf %148, %151 : vector<8x128xf32>
    %153 = arith.negf %152 : vector<8x128xf32>
    %154 = math.exp %153 : vector<8x128xf32>
    %cst_78 = arith.constant 1.000000e+00 : f32
    %155 = vector.broadcast %cst_78 : f32 to vector<8x128xf32>
    %156 = arith.addf %155, %154 : vector<8x128xf32>
    %157 = arith.divf %155, %156 : vector<8x128xf32>
    %158 = arith.subf %140, %147 : vector<8x128xf32>
    %159 = arith.mulf %157, %158 : vector<8x128xf32>
    %160 = arith.addf %147, %159 : vector<8x128xf32>
    %c0_79 = arith.constant 0 : index
    %161 = arith.index_cast %c6_i32 : i32 to index
    %c0_80 = arith.constant 0 : index
    %162 = vector.load %arg8[%c0_79, %161, %c0_80] : memref<8x8x128xf32, #tpu.memory_space<vmem>>, vector<8x1x128xf32>
    %163 = vector.shape_cast %162 : vector<8x1x128xf32> to vector<8x128xf32>
    %164 = vector.shape_cast %160 : vector<8x128xf32> to vector<8x1x128xf32>
    tpu.vector_store %arg8[%c0_79, %161, %c0_80], %164 {strides = array<i32>} : memref<8x8x128xf32, #tpu.memory_space<vmem>>, vector<8x1x128xf32>,
    %c7_i32 = arith.constant 7 : i32
    %165 = arith.index_cast %c7_i32 : i32 to index
    %c0_81 = arith.constant 0 : index
    %c0_82 = arith.constant 0 : index
    %166 = vector.load %arg11[%165, %c0_81, %c0_82] : memref<8x8x128xf32, #tpu.memory_space<vmem>>, vector<1x8x128xf32>
    %167 = vector.shape_cast %166 : vector<1x8x128xf32> to vector<8x128xf32>
    %cst_83 = arith.constant dense<0.000000e+00> : vector<8x128xf32>
    %168 = tpu.matmul %160, %23, %cst_83 {dimension_numbers = #tpu.dot_dimension_numbers<[1], [0], [0], [1], [0, 0, 1, 1], [], []>} : vector<8x128xf32>, vector<128x128xf32>, vector<8x128xf32> -> vector<8x128xf32>
    %169 = arith.index_cast %c7_i32 : i32 to index
    %c0_84 = arith.constant 0 : index
    %c0_85 = arith.constant 0 : index
    %170 = vector.load %arg12[%169, %c0_84, %c0_85] : memref<8x8x128xf32, #tpu.memory_space<vmem>>, vector<1x8x128xf32>
    %171 = vector.shape_cast %170 : vector<1x8x128xf32> to vector<8x128xf32>
    %172 = arith.addf %168, %171 : vector<8x128xf32>
    %173 = arith.negf %172 : vector<8x128xf32>
    %174 = math.exp %173 : vector<8x128xf32>
    %cst_86 = arith.constant 1.000000e+00 : f32
    %175 = vector.broadcast %cst_86 : f32 to vector<8x128xf32>
    %176 = arith.addf %175, %174 : vector<8x128xf32>
    %177 = arith.divf %175, %176 : vector<8x128xf32>
    %178 = arith.subf %160, %167 : vector<8x128xf32>
    %179 = arith.mulf %177, %178 : vector<8x128xf32>
    %180 = arith.addf %167, %179 : vector<8x128xf32>
    %c0_87 = arith.constant 0 : index
    %181 = arith.index_cast %c7_i32 : i32 to index
    %c0_88 = arith.constant 0 : index
    %182 = vector.load %arg8[%c0_87, %181, %c0_88] : memref<8x8x128xf32, #tpu.memory_space<vmem>>, vector<8x1x128xf32>
    %183 = vector.shape_cast %182 : vector<8x1x128xf32> to vector<8x128xf32>
    %184 = vector.shape_cast %180 : vector<8x128xf32> to vector<8x1x128xf32>
    tpu.vector_store %arg8[%c0_87, %181, %c0_88], %184 {strides = array<i32>} : memref<8x8x128xf32, #tpu.memory_space<vmem>>, vector<8x1x128xf32>,
    %c8_i32 = arith.constant 8 : i32
    %c0_89 = arith.constant 0 : index
    %c0_90 = arith.constant 0 : index
    %185 = vector.load %arg9[%c0_89, %c0_90] : memref<8x128xf32, #tpu.memory_space<vmem>>, vector<8x128xf32>
    tpu.vector_store %arg9[%c0_89, %c0_90], %180 {strides = array<i32>} : memref<8x128xf32, #tpu.memory_space<vmem>>, vector<8x128xf32>,
    return
  }
  func.func @transform_0(%arg0: i32) -> (i32, i32, i32) {
    %c0_i32 = arith.constant 0 : i32
    %c0_i32_0 = arith.constant 0 : i32
    %c0_i32_1 = arith.constant 0 : i32
    return %arg0, %c0_i32, %c0_i32_0 : i32, i32, i32
  }
  func.func @transform_1(%arg0: i32) -> (i32, i32) {
    %c0_i32 = arith.constant 0 : i32
    %c0_i32_0 = arith.constant 0 : i32
    %c0_i32_1 = arith.constant 0 : i32
    return %c0_i32, %c0_i32_0 : i32, i32
  }
  func.func @transform_2(%arg0: i32) -> (i32, i32) {
    %c0_i32 = arith.constant 0 : i32
    %c0_i32_0 = arith.constant 0 : i32
    %c0_i32_1 = arith.constant 0 : i32
    return %c0_i32, %c0_i32_0 : i32, i32
  }
  func.func @transform_3(%arg0: i32) -> (i32, i32) {
    %c0_i32 = arith.constant 0 : i32
    %c0_i32_0 = arith.constant 0 : i32
    %c0_i32_1 = arith.constant 0 : i32
    return %c0_i32, %c0_i32_0 : i32, i32
  }
  func.func @transform_4(%arg0: i32) -> (i32, i32) {
    %c0_i32 = arith.constant 0 : i32
    %c0_i32_0 = arith.constant 0 : i32
    %c0_i32_1 = arith.constant 0 : i32
    return %c0_i32, %c0_i32_0 : i32, i32
  }
  func.func @transform_5(%arg0: i32) -> (i32, i32) {
    %c0_i32 = arith.constant 0 : i32
    %c0_i32_0 = arith.constant 0 : i32
    %c0_i32_1 = arith.constant 0 : i32
    return %c0_i32, %c0_i32_0 : i32, i32
  }
  func.func @transform_7(%arg0: i32) -> (i32, i32, i32) {
    %c0_i32 = arith.constant 0 : i32
    %c0_i32_0 = arith.constant 0 : i32
    %c0_i32_1 = arith.constant 0 : i32
    return %c0_i32, %arg0, %c0_i32_0 : i32, i32, i32
  }
}

</mosaic_0001>

<llo_original>
// kernel: minimal_rnn_forward.1
$region0: #{minimal_rnn_forward.1}
  #allocation0 [shape = 'u32[]', space=smem, size = 0x4, offset = 0x4, fixed_abs, tag = 'smem constant byte address 0x4 - core index']
  #allocation1 [shape = 'u32[72,128]{1,0:T(1,128)}', space=vmem, size = 0x9000, scoped, tag = 'internal scratch']
  #allocation2 [shape = 'f32[8,128]{1,0:T(8,128)}', space=vmem, size = 0x1000, scoped, tag = 'scratch operand']
  #allocation3 [shape = 'f32[128,128]{1,0:T(8,128)}', space=vmem, size = 0x10000, scoped, tag = 'scratch operand']
  #allocation4 [shape = 'f32[8,8,128]{2,1,0:T(8,128)}', space=vmem, size = 0x8000, scoped, tag = 'scratch operand']
  #allocation5 [shape = 'f32[8,8,128]{2,1,0:T(8,128)}', space=vmem, size = 0x8000, scoped, tag = 'scratch operand']
  #allocation6 [shape = 's32[1]{0}', space=sflag, size = 0x4, scoped, tag = 'scratch operand']
  #allocation7 [shape = 's32[]', space=sflag, size = 0x4, offset = 0, fixed_abs, tag = 'sflag constant byte address 0x0 - dummy sync flag']
  %s0 = inlined_call_operand.vmem [shape: f32[8,8,16], index: 0, kind: input, shape index: {}]
  %s1 = inlined_call_operand.vmem [shape: f32[16,128], index: 1, kind: input, shape index: {}]
  %s2 = inlined_call_operand.vmem [shape: f32[1,128], index: 2, kind: input, shape index: {}]
  %s3 = inlined_call_operand.vmem [shape: f32[128,128], index: 3, kind: input, shape index: {}]
  %s4 = inlined_call_operand.vmem [shape: f32[1,128], index: 4, kind: input, shape index: {}]
  %s5 = inlined_call_operand.vmem [shape: f32[8,128], index: 5, kind: input, shape index: {}]
  %s6 = inlined_call_operand.vmem [shape: f32[128,128], index: 6, kind: input, shape index: {}]
  %s7 = inlined_call_operand.vmem [shape: f32[8,8,128], index: 7, kind: output, shape index: {}]
  %s8 = sld [smem:[#allocation0]]
  $region61: #{minimal_rnn_forward.1} parent=0
    _
  %s10 = ssub.s32 1, %s8
  %s11 = scalar_select 0, %s10, %s8
  // Predicated region
  $region2: #{minimal_rnn_forward.1} parent=0 // pred_check
    _
  $region3: #{minimal_rnn_forward.1} parent=0 // pred_check_branch
    %13 = sbr.rel (0) target = $region5
  $region4: #{minimal_rnn_forward.1} parent=0 // pred_region
    _
  $region5: #{minimal_rnn_forward.1} parent=0 // pred_fallthru
    _
  // Predicated region
  $region6: #{minimal_rnn_forward.1} parent=0 // pred_check
    _
  $region7: #{minimal_rnn_forward.1} parent=0 // pred_check_branch
    %15 = sbr.rel (0) target = $region9
  $region8: #{minimal_rnn_forward.1} parent=0 // pred_region
    _
  $region9: #{minimal_rnn_forward.1} parent=0 // pred_fallthru
    _
  // Predicated region
  $region10: #{minimal_rnn_forward.1} parent=0 // pred_check
    _
  $region11: #{minimal_rnn_forward.1} parent=0 // pred_check_branch
    %17 = sbr.rel (0) target = $region13
  $region12: #{minimal_rnn_forward.1} parent=0 // pred_region
    _
  $region13: #{minimal_rnn_forward.1} parent=0 // pred_fallthru
    _
  // Predicated region
  $region14: #{minimal_rnn_forward.1} parent=0 // pred_check
    _
  $region15: #{minimal_rnn_forward.1} parent=0 // pred_check_branch
    %19 = sbr.rel (0) target = $region17
  $region16: #{minimal_rnn_forward.1} parent=0 // pred_region
    _
  $region17: #{minimal_rnn_forward.1} parent=0 // pred_fallthru
    _
  // Predicated region
  $region18: #{minimal_rnn_forward.1} parent=0 // pred_check
    _
  $region19: #{minimal_rnn_forward.1} parent=0 // pred_check_branch
    %21 = sbr.rel (0) target = $region21
  $region20: #{minimal_rnn_forward.1} parent=0 // pred_region
    _
  $region21: #{minimal_rnn_forward.1} parent=0 // pred_fallthru
    _
  // Predicated region
  $region22: #{minimal_rnn_forward.1} parent=0 // pred_check
    _
  $region23: #{minimal_rnn_forward.1} parent=0 // pred_check_branch
    %23 = sbr.rel (0) target = $region25
  $region24: #{minimal_rnn_forward.1} parent=0 // pred_region
    _
  $region25: #{minimal_rnn_forward.1} parent=0 // pred_fallthru
    _
  %p24 = scmp.eq.s32.totalorder 0, 0
  // Predicated region
  $region26: #{minimal_rnn_forward.1} parent=0 // pred_check
    %p25 = pneg %p24
  $region27: #{minimal_rnn_forward.1} parent=0 // pred_check_branch
    %27 = sbr.rel (%p25) target = $region29
  $region28: #{minimal_rnn_forward.1} parent=0 // pred_region
    // Predicated region
    $region30: #{minimal_rnn_forward.1} parent=28 // pred_check
      _
    $region31: #{minimal_rnn_forward.1} parent=28 // pred_check_branch
      %29 = sbr.rel (0) target = $region33
    $region32: #{minimal_rnn_forward.1} parent=28 // pred_region
      loop: start=0, step=1, limit=1
      $region34: #{minimal_rnn_forward.1} parent=32 // loop_pre_header
        _
      $region35: #{minimal_rnn_forward.1} parent=32 // loop_header
        %s31 = sphi 0, %s35
        %p32 = scmp.ge.s32.totalorder %s31, 1
        %s36 = sphi %s6, %s6
        %s37 = sphi [#allocation3], [#allocation3]
      $region36: #{minimal_rnn_forward.1} parent=32 // loop_header_branch
        %34 = sbr.rel (%p32) target = $region40
      $region37: #{minimal_rnn_forward.1} parent=32 // loop_body
        %v38 = vld [vmem:[%s36] sm:$0xff]
        %39 = vst [vmem:[%s37] sm:$0xff] %v38
        %v40 = vld [vmem:[%s36 + $0x8] sm:$0xff]
        %41 = vst [vmem:[%s37 + $0x8] sm:$0xff] %v40
        %v42 = vld [vmem:[%s36 + $0x10] sm:$0xff]
        %43 = vst [vmem:[%s37 + $0x10] sm:$0xff] %v42
        %v44 = vld [vmem:[%s36 + $0x18] sm:$0xff]
        %45 = vst [vmem:[%s37 + $0x18] sm:$0xff] %v44
        %v46 = vld [vmem:[%s36 + $0x20] sm:$0xff]
        %47 = vst [vmem:[%s37 + $0x20] sm:$0xff] %v46
        %v48 = vld [vmem:[%s36 + $0x28] sm:$0xff]
        %49 = vst [vmem:[%s37 + $0x28] sm:$0xff] %v48
        %v50 = vld [vmem:[%s36 + $0x30] sm:$0xff]
        %51 = vst [vmem:[%s37 + $0x30] sm:$0xff] %v50
        %v52 = vld [vmem:[%s36 + $0x38] sm:$0xff]
        %53 = vst [vmem:[%s37 + $0x38] sm:$0xff] %v52
        %v54 = vld [vmem:[%s36 + $0x40] sm:$0xff]
        %55 = vst [vmem:[%s37 + $0x40] sm:$0xff] %v54
        %v56 = vld [vmem:[%s36 + $0x48] sm:$0xff]
        %57 = vst [vmem:[%s37 + $0x48] sm:$0xff] %v56
        %v58 = vld [vmem:[%s36 + $0x50] sm:$0xff]
        %59 = vst [vmem:[%s37 + $0x50] sm:$0xff] %v58
        %v60 = vld [vmem:[%s36 + $0x58] sm:$0xff]
        %61 = vst [vmem:[%s37 + $0x58] sm:$0xff] %v60
        %v62 = vld [vmem:[%s36 + $0x60] sm:$0xff]
        %63 = vst [vmem:[%s37 + $0x60] sm:$0xff] %v62
        %v64 = vld [vmem:[%s36 + $0x68] sm:$0xff]
        %65 = vst [vmem:[%s37 + $0x68] sm:$0xff] %v64
        %v66 = vld [vmem:[%s36 + $0x70] sm:$0xff]
        %67 = vst [vmem:[%s37 + $0x70] sm:$0xff] %v66
        %v68 = vld [vmem:[%s36 + $0x78] sm:$0xff]
        %69 = vst [vmem:[%s37 + $0x78] sm:$0xff] %v68
      $region38: #{minimal_rnn_forward.1} parent=32 // loop_footer
        %s35 = sadd.s32 1, %s31
      $region39: #{minimal_rnn_forward.1} parent=32 // loop_footer_branch
        %30 = sbr.rel target = $region35
      $region40: #{minimal_rnn_forward.1} parent=32 // loop_exit
        _
    $region33: #{minimal_rnn_forward.1} parent=28 // pred_fallthru
      _
    // Predicated region
    $region41: #{minimal_rnn_forward.1} parent=28 // pred_check
      _
    $region42: #{minimal_rnn_forward.1} parent=28 // pred_check_branch
      %71 = sbr.rel target = $region44
    $region43: #{minimal_rnn_forward.1} parent=28 // pred_region
      _
    $region44: #{minimal_rnn_forward.1} parent=28 // pred_fallthru
      _
    // Predicated region
    $region45: #{minimal_rnn_forward.1} parent=28 // pred_check
      _
    $region46: #{minimal_rnn_forward.1} parent=28 // pred_check_branch
      %74 = sbr.rel (0) target = $region48
    $region47: #{minimal_rnn_forward.1} parent=28 // pred_region
      %75 = vsyncadd [#allocation6], 2048
    $region48: #{minimal_rnn_forward.1} parent=28 // pred_fallthru
      _
    %v76 = vld [vmem:[%s5] sm:$0xff]
    %77 = vst [vmem:[#allocation2] sm:$0xff] %v76
  $region29: #{minimal_rnn_forward.1} parent=0 // pred_fallthru
    _
  %v78 = vld [vmem:[%s0] sm:$0xff]
  %v79 = vld [vmem:[%s0 + $0x8] sm:$0xff]
  %v80 = vld [vmem:[%s0 + $0x10] sm:$0xff]
  %v81 = vld [vmem:[%s0 + $0x18] sm:$0xff]
  %v82 = vld [vmem:[%s0 + $0x20] sm:$0xff]
  %v83 = vld [vmem:[%s0 + $0x28] sm:$0xff]
  %v84 = vld [vmem:[%s0 + $0x30] sm:$0xff]
  %v85 = vld [vmem:[%s0 + $0x38] sm:$0xff]
  %v86 = vld [vmem:[%s1] sm:$0xff]
  %v87 = vld [vmem:[%s1 + $0x8] sm:$0xff]
  %v88 = vld [vmem:[%s2] sm:$0x1]
  %v90 = vperm.slane %v88, 0
  %vm92 = vcmask 130048
  %v94 = vsel %vm92, %v78, 0
  %v97 = vsel %vm92, %v79, 0
  %v100 = vsel %vm92, %v80, 0
  %v103 = vsel %vm92, %v81, 0
  %v106 = vsel %vm92, %v82, 0
  %v109 = vsel %vm92, %v83, 0
  %v112 = vsel %vm92, %v84, 0
  %v115 = vsel %vm92, %v85, 0
  %117 = vmatpush.msra.mxu0 0.0
  %118 = vmatpush.msra.mxu0 0.0
  %119 = vmatpush.msra.mxu0 0.0
  %120 = vmatpush.msra.mxu0 0.0
  %121 = vmatpush.msra.mxu0 0.0
  %122 = vmatpush.msra.mxu0 0.0
  %123 = vmatpush.msra.mxu0 0.0
  %124 = vmatpush.msra.mxu0 0.0
  %125 = vmatpush.msra.mxu0 0.0
  %126 = vmatpush.msra.mxu0 0.0
  %127 = vmatpush.msra.mxu0 0.0
  %128 = vmatpush.msra.mxu0 0.0
  %129 = vmatpush.msra.mxu0 0.0
  %130 = vmatpush.msra.mxu0 0.0
  %131 = vmatpush.msra.mxu0 %v87
  %132 = vmatpush.msra.mxu0 %v86
  %133 = vmatmul.f32.gmra.mxu0 %v94
  %v134 = vpop.f32.mrf.mxu0
  %v135 = vadd.f32 %v90, %v134
  %136 = vmatmul.f32.gmra.mxu0 %v97
  %v137 = vpop.f32.mrf.mxu0
  %v138 = vadd.f32 %v90, %v137
  %139 = vmatmul.f32.gmra.mxu0 %v100
  %v140 = vpop.f32.mrf.mxu0
  %v141 = vadd.f32 %v90, %v140
  %142 = vmatmul.f32.gmra.mxu0 %v103
  %v143 = vpop.f32.mrf.mxu0
  %v144 = vadd.f32 %v90, %v143
  %145 = vmatmul.f32.gmra.mxu0 %v106
  %v146 = vpop.f32.mrf.mxu0
  %v147 = vadd.f32 %v90, %v146
  %148 = vmatmul.f32.gmra.mxu0 %v109
  %v149 = vpop.f32.mrf.mxu0
  %v150 = vadd.f32 %v90, %v149
  %151 = vmatmul.f32.gmra.mxu0 %v112
  %v152 = vpop.f32.mrf.mxu0
  %v153 = vadd.f32 %v90, %v152
  %154 = vmatmul.f32.gmra.mxu0 %v115
  %v155 = vpop.f32.mrf.mxu0
  %v156 = vadd.f32 %v90, %v155
  %157 = vdwg.mxu0
  %v158 = vtanh.pop %v135
  %v159 = vtanh.pop %v138
  %v160 = vtanh.pop %v141
  %v161 = vtanh.pop %v144
  %v162 = vtanh.pop %v147
  %v163 = vtanh.pop %v150
  %v164 = vtanh.pop %v153
  %v165 = vtanh.pop %v156
  %v166 = vld [vmem:[%s3] sm:$0xff]
  %v167 = vld [vmem:[%s3 + $0x8] sm:$0xff]
  %v168 = vld [vmem:[%s3 + $0x10] sm:$0xff]
  %v169 = vld [vmem:[%s3 + $0x18] sm:$0xff]
  %v170 = vld [vmem:[%s3 + $0x20] sm:$0xff]
  %v171 = vld [vmem:[%s3 + $0x28] sm:$0xff]
  %v172 = vld [vmem:[%s3 + $0x30] sm:$0xff]
  %v173 = vld [vmem:[%s3 + $0x38] sm:$0xff]
  %v174 = vld [vmem:[%s3 + $0x40] sm:$0xff]
  %v175 = vld [vmem:[%s3 + $0x48] sm:$0xff]
  %v176 = vld [vmem:[%s3 + $0x50] sm:$0xff]
  %v177 = vld [vmem:[%s3 + $0x58] sm:$0xff]
  %v178 = vld [vmem:[%s3 + $0x60] sm:$0xff]
  %v179 = vld [vmem:[%s3 + $0x68] sm:$0xff]
  %v180 = vld [vmem:[%s3 + $0x70] sm:$0xff]
  %v181 = vld [vmem:[%s3 + $0x78] sm:$0xff]
  %v182 = vld [vmem:[%s4] sm:$0x1]
  %v184 = vperm.slane %v182, 0
  %186 = vmatpush.msra.mxu0 %v181
  %187 = vmatpush.msra.mxu0 %v180
  %188 = vmatpush.msra.mxu0 %v179
  %189 = vmatpush.msra.mxu0 %v178
  %190 = vmatpush.msra.mxu0 %v177
  %191 = vmatpush.msra.mxu0 %v176
  %192 = vmatpush.msra.mxu0 %v175
  %193 = vmatpush.msra.mxu0 %v174
  %194 = vmatpush.msra.mxu0 %v173
  %195 = vmatpush.msra.mxu0 %v172
  %196 = vmatpush.msra.mxu0 %v171
  %197 = vmatpush.msra.mxu0 %v170
  %198 = vmatpush.msra.mxu0 %v169
  %199 = vmatpush.msra.mxu0 %v168
  %200 = vmatpush.msra.mxu0 %v167
  %201 = vmatpush.msra.mxu0 %v166
  %202 = vmatmul.f32.gmra.mxu0 %v158
  %v203 = vpop.f32.mrf.mxu0
  %v204 = vadd.f32 %v184, %v203
  %205 = vmatmul.f32.gmra.mxu0 %v159
  %v206 = vpop.f32.mrf.mxu0
  %v207 = vadd.f32 %v184, %v206
  %208 = vmatmul.f32.gmra.mxu0 %v160
  %v209 = vpop.f32.mrf.mxu0
  %v210 = vadd.f32 %v184, %v209
  %211 = vmatmul.f32.gmra.mxu0 %v161
  %v212 = vpop.f32.mrf.mxu0
  %v213 = vadd.f32 %v184, %v212
  %214 = vmatmul.f32.gmra.mxu0 %v162
  %v215 = vpop.f32.mrf.mxu0
  %v216 = vadd.f32 %v184, %v215
  %217 = vmatmul.f32.gmra.mxu0 %v163
  %v218 = vpop.f32.mrf.mxu0
  %v219 = vadd.f32 %v184, %v218
  %220 = vmatmul.f32.gmra.mxu0 %v164
  %v221 = vpop.f32.mrf.mxu0
  %v222 = vadd.f32 %v184, %v221
  %223 = vmatmul.f32.gmra.mxu0 %v165
  %v224 = vpop.f32.mrf.mxu0
  %v225 = vadd.f32 %v184, %v224
  %226 = vdwg.mxu0
  %227 = vst [vmem:[#allocation4] sm:$0xff] %v158
  %228 = vst [vmem:[#allocation4 + $0x8] sm:$0xff] %v159
  %229 = vst [vmem:[#allocation4 + $0x10] sm:$0xff] %v160
  %230 = vst [vmem:[#allocation4 + $0x18] sm:$0xff] %v161
  %231 = vst [vmem:[#allocation4 + $0x20] sm:$0xff] %v162
  %232 = vst [vmem:[#allocation4 + $0x28] sm:$0xff] %v163
  %233 = vst [vmem:[#allocation4 + $0x30] sm:$0xff] %v164
  %234 = vst [vmem:[#allocation4 + $0x38] sm:$0xff] %v165
  %235 = vst [vmem:[#allocation5] sm:$0xff] %v204
  %236 = vst [vmem:[#allocation5 + $0x8] sm:$0xff] %v207
  %237 = vst [vmem:[#allocation5 + $0x10] sm:$0xff] %v210
  %238 = vst [vmem:[#allocation5 + $0x18] sm:$0xff] %v213
  %239 = vst [vmem:[#allocation5 + $0x20] sm:$0xff] %v216
  %240 = vst [vmem:[#allocation5 + $0x28] sm:$0xff] %v219
  %241 = vst [vmem:[#allocation5 + $0x30] sm:$0xff] %v222
  %242 = vst [vmem:[#allocation5 + $0x38] sm:$0xff] %v225
  // Predicated region
  $region49: #{minimal_rnn_forward.1} parent=0 // pred_check
    %p243 = pneg %p24
  $region50: #{minimal_rnn_forward.1} parent=0 // pred_check_branch
    %245 = sbr.rel (%p243) target = $region52
  $region51: #{minimal_rnn_forward.1} parent=0 // pred_region
    %s246 = smul.u32 128, 1
    %s247 = sshll.u32 %s246, 4
    %248 = dma.done [#allocation6], %s247
  $region52: #{minimal_rnn_forward.1} parent=0 // pred_fallthru
    _
  %v249 = vld [vmem:[#allocation3] sm:$0xff]
  %v250 = vld [vmem:[#allocation3 + $0x8] sm:$0xff]
  %v251 = vld [vmem:[#allocation3 + $0x10] sm:$0xff]
  %v252 = vld [vmem:[#allocation3 + $0x18] sm:$0xff]
  %v253 = vld [vmem:[#allocation3 + $0x20] sm:$0xff]
  %v254 = vld [vmem:[#allocation3 + $0x28] sm:$0xff]
  %v255 = vld [vmem:[#allocation3 + $0x30] sm:$0xff]
  %v256 = vld [vmem:[#allocation3 + $0x38] sm:$0xff]
  %v257 = vld [vmem:[#allocation3 + $0x40] sm:$0xff]
  %v258 = vld [vmem:[#allocation3 + $0x48] sm:$0xff]
  %v259 = vld [vmem:[#allocation3 + $0x50] sm:$0xff]
  %v260 = vld [vmem:[#allocation3 + $0x58] sm:$0xff]
  %v261 = vld [vmem:[#allocation3 + $0x60] sm:$0xff]
  %v262 = vld [vmem:[#allocation3 + $0x68] sm:$0xff]
  %v263 = vld [vmem:[#allocation3 + $0x70] sm:$0xff]
  %v264 = vld [vmem:[#allocation3 + $0x78] sm:$0xff]
  %v265 = vld [vmem:[#allocation2] sm:$0xff]
  %v266 = vld [vmem:[#allocation4] sm:$0xff]
  %v267 = vld [vmem:[#allocation5] sm:$0xff]
  %268 = vmatpush.msra.mxu0 %v264
  %269 = vmatpush.msra.mxu0 %v263
  %270 = vmatpush.msra.mxu0 %v262
  %271 = vmatpush.msra.mxu0 %v261
  %272 = vmatpush.msra.mxu0 %v260
  %273 = vmatpush.msra.mxu0 %v259
  %274 = vmatpush.msra.mxu0 %v258
  %275 = vmatpush.msra.mxu0 %v257
  %276 = vmatpush.msra.mxu0 %v256
  %277 = vmatpush.msra.mxu0 %v255
  %278 = vmatpush.msra.mxu0 %v254
  %279 = vmatpush.msra.mxu0 %v253
  %280 = vmatpush.msra.mxu0 %v252
  %281 = vmatpush.msra.mxu0 %v251
  %282 = vmatpush.msra.mxu0 %v250
  %283 = vmatpush.msra.mxu0 %v249
  %284 = vmatmul.f32.gmra.mxu0 %v265
  %v285 = vpop.f32.mrf.mxu0
  %v286 = vadd.f32 %v267, %v285
  %287 = vdwg.mxu0
  %v288 = vxor.u32 %v286, 2147483648
  %v289 = vmul.f32 %v288, 1.442695
  %v290 = vpow.pop %v289
  %v291 = vadd.f32 %v290, 1.0
  %v292 = vrcp.pop %v291
  %v293 = vmul.f32 %v291, %v292
  %v294 = vsub.f32 1.0, %v293
  %v295 = vmul.f32 %v292, %v294
  %v296 = vadd.f32 %v292, %v295
  %vm297 = vweird.f32 %v291
  %vm298 = vweird.f32 %v292
  %vm299 = vmor %vm297, %vm298
  %v300 = vsel %vm299, %v292, %v296
  %v301 = vand.u32 2147483647, %v291
  %vm302 = vcmp.eq.f32.partialorder %v301, 8.507059e+37
  %v303 = vand.u32 %v291, 2147483648
  %v304 = vor.u32 1.1754944e-38, %v303
  %v305 = vsel %vm302, %v304, %v300
  %v306 = vmul.f32 1.0, %v305
  %v307 = vsub.f32 %v265, %v266
  %v308 = vmul.f32 %v306, %v307
  %v309 = vadd.f32 %v266, %v308
  %v311 = vrot.slane %v309, 1
  %v312 = vrot.slane %v309, 2
  %v313 = vrot.slane %v309, 3
  %v314 = vrot.slane %v309, 4
  %v315 = vrot.slane %v309, 5
  %v316 = vrot.slane %v309, 6
  %v317 = vrot.slane %v309, 7
  %325 = vst [vmem:[%s7] sm:$0x1] %v309
  %326 = vst [vmem:[%s7 + $0x8] sm:$0x1] %v311
  %327 = vst [vmem:[%s7 + $0x10] sm:$0x1] %v312
  %328 = vst [vmem:[%s7 + $0x18] sm:$0x1] %v313
  %329 = vst [vmem:[%s7 + $0x20] sm:$0x1] %v314
  %330 = vst [vmem:[%s7 + $0x28] sm:$0x1] %v315
  %331 = vst [vmem:[%s7 + $0x30] sm:$0x1] %v316
  %332 = vst [vmem:[%s7 + $0x38] sm:$0x1] %v317
  %s333 = scalar_lea.vmem [#allocation4], 8
  %v334 = vld [vmem:[%s333] sm:$0xff]
  %s335 = scalar_lea.vmem [#allocation5], 8
  %v336 = vld [vmem:[%s335] sm:$0xff]
  %337 = vmatpush.msra.mxu0 %v264
  %338 = vmatpush.msra.mxu0 %v263
  %339 = vmatpush.msra.mxu0 %v262
  %340 = vmatpush.msra.mxu0 %v261
  %341 = vmatpush.msra.mxu0 %v260
  %342 = vmatpush.msra.mxu0 %v259
  %343 = vmatpush.msra.mxu0 %v258
  %344 = vmatpush.msra.mxu0 %v257
  %345 = vmatpush.msra.mxu0 %v256
  %346 = vmatpush.msra.mxu0 %v255
  %347 = vmatpush.msra.mxu0 %v254
  %348 = vmatpush.msra.mxu0 %v253
  %349 = vmatpush.msra.mxu0 %v252
  %350 = vmatpush.msra.mxu0 %v251
  %351 = vmatpush.msra.mxu0 %v250
  %352 = vmatpush.msra.mxu0 %v249
  %353 = vmatmul.f32.gmra.mxu0 %v309
  %v354 = vpop.f32.mrf.mxu0
  %v355 = vadd.f32 %v336, %v354
  %356 = vdwg.mxu0
  %v357 = vxor.u32 %v355, 2147483648
  %v358 = vmul.f32 %v357, 1.442695
  %v359 = vpow.pop %v358
  %v360 = vadd.f32 %v359, 1.0
  %v361 = vrcp.pop %v360
  %v362 = vmul.f32 %v360, %v361
  %v363 = vsub.f32 1.0, %v362
  %v364 = vmul.f32 %v361, %v363
  %v365 = vadd.f32 %v361, %v364
  %vm366 = vweird.f32 %v360
  %vm367 = vweird.f32 %v361
  %vm368 = vmor %vm366, %vm367
  %v369 = vsel %vm368, %v361, %v365
  %v370 = vand.u32 2147483647, %v360
  %vm371 = vcmp.eq.f32.partialorder %v370, 8.507059e+37
  %v372 = vand.u32 %v360, 2147483648
  %v373 = vor.u32 1.1754944e-38, %v372
  %v374 = vsel %vm371, %v373, %v369
  %v375 = vmul.f32 1.0, %v374
  %v376 = vsub.f32 %v309, %v334
  %v377 = vmul.f32 %v375, %v376
  %v378 = vadd.f32 %v334, %v377
  %v380 = vrot.slane %v378, 1
  %v381 = vrot.slane %v378, 2
  %v382 = vrot.slane %v378, 3
  %v383 = vrot.slane %v378, 4
  %v384 = vrot.slane %v378, 5
  %v385 = vrot.slane %v378, 6
  %v386 = vrot.slane %v378, 7
  %394 = vst [vmem:[%s7 + $0x1] sm:$0x1] %v378
  %395 = vst [vmem:[%s7 + $0x9] sm:$0x1] %v380
  %396 = vst [vmem:[%s7 + $0x11] sm:$0x1] %v381
  %397 = vst [vmem:[%s7 + $0x19] sm:$0x1] %v382
  %398 = vst [vmem:[%s7 + $0x21] sm:$0x1] %v383
  %399 = vst [vmem:[%s7 + $0x29] sm:$0x1] %v384
  %400 = vst [vmem:[%s7 + $0x31] sm:$0x1] %v385
  %401 = vst [vmem:[%s7 + $0x39] sm:$0x1] %v386
  %s402 = scalar_lea.vmem [#allocation4], 16
  %v403 = vld [vmem:[%s402] sm:$0xff]
  %s404 = scalar_lea.vmem [#allocation5], 16
  %v405 = vld [vmem:[%s404] sm:$0xff]
  %406 = vmatpush.msra.mxu0 %v264
  %407 = vmatpush.msra.mxu0 %v263
  %408 = vmatpush.msra.mxu0 %v262
  %409 = vmatpush.msra.mxu0 %v261
  %410 = vmatpush.msra.mxu0 %v260
  %411 = vmatpush.msra.mxu0 %v259
  %412 = vmatpush.msra.mxu0 %v258
  %413 = vmatpush.msra.mxu0 %v257
  %414 = vmatpush.msra.mxu0 %v256
  %415 = vmatpush.msra.mxu0 %v255
  %416 = vmatpush.msra.mxu0 %v254
  %417 = vmatpush.msra.mxu0 %v253
  %418 = vmatpush.msra.mxu0 %v252
  %419 = vmatpush.msra.mxu0 %v251
  %420 = vmatpush.msra.mxu0 %v250
  %421 = vmatpush.msra.mxu0 %v249
  %422 = vmatmul.f32.gmra.mxu0 %v378
  %v423 = vpop.f32.mrf.mxu0
  %v424 = vadd.f32 %v405, %v423
  %425 = vdwg.mxu0
  %v426 = vxor.u32 %v424, 2147483648
  %v427 = vmul.f32 %v426, 1.442695
  %v428 = vpow.pop %v427
  %v429 = vadd.f32 %v428, 1.0
  %v430 = vrcp.pop %v429
  %v431 = vmul.f32 %v429, %v430
  %v432 = vsub.f32 1.0, %v431
  %v433 = vmul.f32 %v430, %v432
  %v434 = vadd.f32 %v430, %v433
  %vm435 = vweird.f32 %v429
  %vm436 = vweird.f32 %v430
  %vm437 = vmor %vm435, %vm436
  %v438 = vsel %vm437, %v430, %v434
  %v439 = vand.u32 2147483647, %v429
  %vm440 = vcmp.eq.f32.partialorder %v439, 8.507059e+37
  %v441 = vand.u32 %v429, 2147483648
  %v442 = vor.u32 1.1754944e-38, %v441
  %v443 = vsel %vm440, %v442, %v438
  %v444 = vmul.f32 1.0, %v443
  %v445 = vsub.f32 %v378, %v403
  %v446 = vmul.f32 %v444, %v445
  %v447 = vadd.f32 %v403, %v446
  %v449 = vrot.slane %v447, 1
  %v450 = vrot.slane %v447, 2
  %v451 = vrot.slane %v447, 3
  %v452 = vrot.slane %v447, 4
  %v453 = vrot.slane %v447, 5
  %v454 = vrot.slane %v447, 6
  %v455 = vrot.slane %v447, 7
  %463 = vst [vmem:[%s7 + $0x2] sm:$0x1] %v447
  %464 = vst [vmem:[%s7 + $0xa] sm:$0x1] %v449
  %465 = vst [vmem:[%s7 + $0x12] sm:$0x1] %v450
  %466 = vst [vmem:[%s7 + $0x1a] sm:$0x1] %v451
  %467 = vst [vmem:[%s7 + $0x22] sm:$0x1] %v452
  %468 = vst [vmem:[%s7 + $0x2a] sm:$0x1] %v453
  %469 = vst [vmem:[%s7 + $0x32] sm:$0x1] %v454
  %470 = vst [vmem:[%s7 + $0x3a] sm:$0x1] %v455
  %s471 = scalar_lea.vmem [#allocation4], 24
  %v472 = vld [vmem:[%s471] sm:$0xff]
  %s473 = scalar_lea.vmem [#allocation5], 24
  %v474 = vld [vmem:[%s473] sm:$0xff]
  %475 = vmatpush.msra.mxu0 %v264
  %476 = vmatpush.msra.mxu0 %v263
  %477 = vmatpush.msra.mxu0 %v262
  %478 = vmatpush.msra.mxu0 %v261
  %479 = vmatpush.msra.mxu0 %v260
  %480 = vmatpush.msra.mxu0 %v259
  %481 = vmatpush.msra.mxu0 %v258
  %482 = vmatpush.msra.mxu0 %v257
  %483 = vmatpush.msra.mxu0 %v256
  %484 = vmatpush.msra.mxu0 %v255
  %485 = vmatpush.msra.mxu0 %v254
  %486 = vmatpush.msra.mxu0 %v253
  %487 = vmatpush.msra.mxu0 %v252
  %488 = vmatpush.msra.mxu0 %v251
  %489 = vmatpush.msra.mxu0 %v250
  %490 = vmatpush.msra.mxu0 %v249
  %491 = vmatmul.f32.gmra.mxu0 %v447
  %v492 = vpop.f32.mrf.mxu0
  %v493 = vadd.f32 %v474, %v492
  %494 = vdwg.mxu0
  %v495 = vxor.u32 %v493, 2147483648
  %v496 = vmul.f32 %v495, 1.442695
  %v497 = vpow.pop %v496
  %v498 = vadd.f32 %v497, 1.0
  %v499 = vrcp.pop %v498
  %v500 = vmul.f32 %v498, %v499
  %v501 = vsub.f32 1.0, %v500
  %v502 = vmul.f32 %v499, %v501
  %v503 = vadd.f32 %v499, %v502
  %vm504 = vweird.f32 %v498
  %vm505 = vweird.f32 %v499
  %vm506 = vmor %vm504, %vm505
  %v507 = vsel %vm506, %v499, %v503
  %v508 = vand.u32 2147483647, %v498
  %vm509 = vcmp.eq.f32.partialorder %v508, 8.507059e+37
  %v510 = vand.u32 %v498, 2147483648
  %v511 = vor.u32 1.1754944e-38, %v510
  %v512 = vsel %vm509, %v511, %v507
  %v513 = vmul.f32 1.0, %v512
  %v514 = vsub.f32 %v447, %v472
  %v515 = vmul.f32 %v513, %v514
  %v516 = vadd.f32 %v472, %v515
  %v518 = vrot.slane %v516, 1
  %v519 = vrot.slane %v516, 2
  %v520 = vrot.slane %v516, 3
  %v521 = vrot.slane %v516, 4
  %v522 = vrot.slane %v516, 5
  %v523 = vrot.slane %v516, 6
  %v524 = vrot.slane %v516, 7
  %532 = vst [vmem:[%s7 + $0x3] sm:$0x1] %v516
  %533 = vst [vmem:[%s7 + $0xb] sm:$0x1] %v518
  %534 = vst [vmem:[%s7 + $0x13] sm:$0x1] %v519
  %535 = vst [vmem:[%s7 + $0x1b] sm:$0x1] %v520
  %536 = vst [vmem:[%s7 + $0x23] sm:$0x1] %v521
  %537 = vst [vmem:[%s7 + $0x2b] sm:$0x1] %v522
  %538 = vst [vmem:[%s7 + $0x33] sm:$0x1] %v523
  %539 = vst [vmem:[%s7 + $0x3b] sm:$0x1] %v524
  %s540 = scalar_lea.vmem [#allocation4], 32
  %v541 = vld [vmem:[%s540] sm:$0xff]
  %s542 = scalar_lea.vmem [#allocation5], 32
  %v543 = vld [vmem:[%s542] sm:$0xff]
  %544 = vmatpush.msra.mxu0 %v264
  %545 = vmatpush.msra.mxu0 %v263
  %546 = vmatpush.msra.mxu0 %v262
  %547 = vmatpush.msra.mxu0 %v261
  %548 = vmatpush.msra.mxu0 %v260
  %549 = vmatpush.msra.mxu0 %v259
  %550 = vmatpush.msra.mxu0 %v258
  %551 = vmatpush.msra.mxu0 %v257
  %552 = vmatpush.msra.mxu0 %v256
  %553 = vmatpush.msra.mxu0 %v255
  %554 = vmatpush.msra.mxu0 %v254
  %555 = vmatpush.msra.mxu0 %v253
  %556 = vmatpush.msra.mxu0 %v252
  %557 = vmatpush.msra.mxu0 %v251
  %558 = vmatpush.msra.mxu0 %v250
  %559 = vmatpush.msra.mxu0 %v249
  %560 = vmatmul.f32.gmra.mxu0 %v516
  %v561 = vpop.f32.mrf.mxu0
  %v562 = vadd.f32 %v543, %v561
  %563 = vdwg.mxu0
  %v564 = vxor.u32 %v562, 2147483648
  %v565 = vmul.f32 %v564, 1.442695
  %v566 = vpow.pop %v565
  %v567 = vadd.f32 %v566, 1.0
  %v568 = vrcp.pop %v567
  %v569 = vmul.f32 %v567, %v568
  %v570 = vsub.f32 1.0, %v569
  %v571 = vmul.f32 %v568, %v570
  %v572 = vadd.f32 %v568, %v571
  %vm573 = vweird.f32 %v567
  %vm574 = vweird.f32 %v568
  %vm575 = vmor %vm573, %vm574
  %v576 = vsel %vm575, %v568, %v572
  %v577 = vand.u32 2147483647, %v567
  %vm578 = vcmp.eq.f32.partialorder %v577, 8.507059e+37
  %v579 = vand.u32 %v567, 2147483648
  %v580 = vor.u32 1.1754944e-38, %v579
  %v581 = vsel %vm578, %v580, %v576
  %v582 = vmul.f32 1.0, %v581
  %v583 = vsub.f32 %v516, %v541
  %v584 = vmul.f32 %v582, %v583
  %v585 = vadd.f32 %v541, %v584
  %v587 = vrot.slane %v585, 1
  %v588 = vrot.slane %v585, 2
  %v589 = vrot.slane %v585, 3
  %v590 = vrot.slane %v585, 4
  %v591 = vrot.slane %v585, 5
  %v592 = vrot.slane %v585, 6
  %v593 = vrot.slane %v585, 7
  %601 = vst [vmem:[%s7 + $0x4] sm:$0x1] %v585
  %602 = vst [vmem:[%s7 + $0xc] sm:$0x1] %v587
  %603 = vst [vmem:[%s7 + $0x14] sm:$0x1] %v588
  %604 = vst [vmem:[%s7 + $0x1c] sm:$0x1] %v589
  %605 = vst [vmem:[%s7 + $0x24] sm:$0x1] %v590
  %606 = vst [vmem:[%s7 + $0x2c] sm:$0x1] %v591
  %607 = vst [vmem:[%s7 + $0x34] sm:$0x1] %v592
  %608 = vst [vmem:[%s7 + $0x3c] sm:$0x1] %v593
  %s609 = scalar_lea.vmem [#allocation4], 40
  %v610 = vld [vmem:[%s609] sm:$0xff]
  %s611 = scalar_lea.vmem [#allocation5], 40
  %v612 = vld [vmem:[%s611] sm:$0xff]
  %613 = vmatpush.msra.mxu0 %v264
  %614 = vmatpush.msra.mxu0 %v263
  %615 = vmatpush.msra.mxu0 %v262
  %616 = vmatpush.msra.mxu0 %v261
  %617 = vmatpush.msra.mxu0 %v260
  %618 = vmatpush.msra.mxu0 %v259
  %619 = vmatpush.msra.mxu0 %v258
  %620 = vmatpush.msra.mxu0 %v257
  %621 = vmatpush.msra.mxu0 %v256
  %622 = vmatpush.msra.mxu0 %v255
  %623 = vmatpush.msra.mxu0 %v254
  %624 = vmatpush.msra.mxu0 %v253
  %625 = vmatpush.msra.mxu0 %v252
  %626 = vmatpush.msra.mxu0 %v251
  %627 = vmatpush.msra.mxu0 %v250
  %628 = vmatpush.msra.mxu0 %v249
  %629 = vmatmul.f32.gmra.mxu0 %v585
  %v630 = vpop.f32.mrf.mxu0
  %v631 = vadd.f32 %v612, %v630
  %632 = vdwg.mxu0
  %v633 = vxor.u32 %v631, 2147483648
  %v634 = vmul.f32 %v633, 1.442695
  %v635 = vpow.pop %v634
  %v636 = vadd.f32 %v635, 1.0
  %v637 = vrcp.pop %v636
  %v638 = vmul.f32 %v636, %v637
  %v639 = vsub.f32 1.0, %v638
  %v640 = vmul.f32 %v637, %v639
  %v641 = vadd.f32 %v637, %v640
  %vm642 = vweird.f32 %v636
  %vm643 = vweird.f32 %v637
  %vm644 = vmor %vm642, %vm643
  %v645 = vsel %vm644, %v637, %v641
  %v646 = vand.u32 2147483647, %v636
  %vm647 = vcmp.eq.f32.partialorder %v646, 8.507059e+37
  %v648 = vand.u32 %v636, 2147483648
  %v649 = vor.u32 1.1754944e-38, %v648
  %v650 = vsel %vm647, %v649, %v645
  %v651 = vmul.f32 1.0, %v650
  %v652 = vsub.f32 %v585, %v610
  %v653 = vmul.f32 %v651, %v652
  %v654 = vadd.f32 %v610, %v653
  %v656 = vrot.slane %v654, 1
  %v657 = vrot.slane %v654, 2
  %v658 = vrot.slane %v654, 3
  %v659 = vrot.slane %v654, 4
  %v660 = vrot.slane %v654, 5
  %v661 = vrot.slane %v654, 6
  %v662 = vrot.slane %v654, 7
  %670 = vst [vmem:[%s7 + $0x5] sm:$0x1] %v654
  %671 = vst [vmem:[%s7 + $0xd] sm:$0x1] %v656
  %672 = vst [vmem:[%s7 + $0x15] sm:$0x1] %v657
  %673 = vst [vmem:[%s7 + $0x1d] sm:$0x1] %v658
  %674 = vst [vmem:[%s7 + $0x25] sm:$0x1] %v659
  %675 = vst [vmem:[%s7 + $0x2d] sm:$0x1] %v660
  %676 = vst [vmem:[%s7 + $0x35] sm:$0x1] %v661
  %677 = vst [vmem:[%s7 + $0x3d] sm:$0x1] %v662
  %s678 = scalar_lea.vmem [#allocation4], 48
  %v679 = vld [vmem:[%s678] sm:$0xff]
  %s680 = scalar_lea.vmem [#allocation5], 48
  %v681 = vld [vmem:[%s680] sm:$0xff]
  %682 = vmatpush.msra.mxu0 %v264
  %683 = vmatpush.msra.mxu0 %v263
  %684 = vmatpush.msra.mxu0 %v262
  %685 = vmatpush.msra.mxu0 %v261
  %686 = vmatpush.msra.mxu0 %v260
  %687 = vmatpush.msra.mxu0 %v259
  %688 = vmatpush.msra.mxu0 %v258
  %689 = vmatpush.msra.mxu0 %v257
  %690 = vmatpush.msra.mxu0 %v256
  %691 = vmatpush.msra.mxu0 %v255
  %692 = vmatpush.msra.mxu0 %v254
  %693 = vmatpush.msra.mxu0 %v253
  %694 = vmatpush.msra.mxu0 %v252
  %695 = vmatpush.msra.mxu0 %v251
  %696 = vmatpush.msra.mxu0 %v250
  %697 = vmatpush.msra.mxu0 %v249
  %698 = vmatmul.f32.gmra.mxu0 %v654
  %v699 = vpop.f32.mrf.mxu0
  %v700 = vadd.f32 %v681, %v699
  %701 = vdwg.mxu0
  %v702 = vxor.u32 %v700, 2147483648
  %v703 = vmul.f32 %v702, 1.442695
  %v704 = vpow.pop %v703
  %v705 = vadd.f32 %v704, 1.0
  %v706 = vrcp.pop %v705
  %v707 = vmul.f32 %v705, %v706
  %v708 = vsub.f32 1.0, %v707
  %v709 = vmul.f32 %v706, %v708
  %v710 = vadd.f32 %v706, %v709
  %vm711 = vweird.f32 %v705
  %vm712 = vweird.f32 %v706
  %vm713 = vmor %vm711, %vm712
  %v714 = vsel %vm713, %v706, %v710
  %v715 = vand.u32 2147483647, %v705
  %vm716 = vcmp.eq.f32.partialorder %v715, 8.507059e+37
  %v717 = vand.u32 %v705, 2147483648
  %v718 = vor.u32 1.1754944e-38, %v717
  %v719 = vsel %vm716, %v718, %v714
  %v720 = vmul.f32 1.0, %v719
  %v721 = vsub.f32 %v654, %v679
  %v722 = vmul.f32 %v720, %v721
  %v723 = vadd.f32 %v679, %v722
  %v725 = vrot.slane %v723, 1
  %v726 = vrot.slane %v723, 2
  %v727 = vrot.slane %v723, 3
  %v728 = vrot.slane %v723, 4
  %v729 = vrot.slane %v723, 5
  %v730 = vrot.slane %v723, 6
  %v731 = vrot.slane %v723, 7
  %739 = vst [vmem:[%s7 + $0x6] sm:$0x1] %v723
  %740 = vst [vmem:[%s7 + $0xe] sm:$0x1] %v725
  %741 = vst [vmem:[%s7 + $0x16] sm:$0x1] %v726
  %742 = vst [vmem:[%s7 + $0x1e] sm:$0x1] %v727
  %743 = vst [vmem:[%s7 + $0x26] sm:$0x1] %v728
  %744 = vst [vmem:[%s7 + $0x2e] sm:$0x1] %v729
  %745 = vst [vmem:[%s7 + $0x36] sm:$0x1] %v730
  %746 = vst [vmem:[%s7 + $0x3e] sm:$0x1] %v731
  %s747 = scalar_lea.vmem [#allocation4], 56
  %v748 = vld [vmem:[%s747] sm:$0xff]
  %s749 = scalar_lea.vmem [#allocation5], 56
  %v750 = vld [vmem:[%s749] sm:$0xff]
  %751 = vmatpush.msra.mxu0 %v264
  %752 = vmatpush.msra.mxu0 %v263
  %753 = vmatpush.msra.mxu0 %v262
  %754 = vmatpush.msra.mxu0 %v261
  %755 = vmatpush.msra.mxu0 %v260
  %756 = vmatpush.msra.mxu0 %v259
  %757 = vmatpush.msra.mxu0 %v258
  %758 = vmatpush.msra.mxu0 %v257
  %759 = vmatpush.msra.mxu0 %v256
  %760 = vmatpush.msra.mxu0 %v255
  %761 = vmatpush.msra.mxu0 %v254
  %762 = vmatpush.msra.mxu0 %v253
  %763 = vmatpush.msra.mxu0 %v252
  %764 = vmatpush.msra.mxu0 %v251
  %765 = vmatpush.msra.mxu0 %v250
  %766 = vmatpush.msra.mxu0 %v249
  %767 = vmatmul.f32.gmra.mxu0 %v723
  %v768 = vpop.f32.mrf.mxu0
  %v769 = vadd.f32 %v750, %v768
  %770 = vdwg.mxu0
  %v771 = vxor.u32 %v769, 2147483648
  %v772 = vmul.f32 %v771, 1.442695
  %v773 = vpow.pop %v772
  %v774 = vadd.f32 %v773, 1.0
  %v775 = vrcp.pop %v774
  %v776 = vmul.f32 %v774, %v775
  %v777 = vsub.f32 1.0, %v776
  %v778 = vmul.f32 %v775, %v777
  %v779 = vadd.f32 %v775, %v778
  %vm780 = vweird.f32 %v774
  %vm781 = vweird.f32 %v775
  %vm782 = vmor %vm780, %vm781
  %v783 = vsel %vm782, %v775, %v779
  %v784 = vand.u32 2147483647, %v774
  %vm785 = vcmp.eq.f32.partialorder %v784, 8.507059e+37
  %v786 = vand.u32 %v774, 2147483648
  %v787 = vor.u32 1.1754944e-38, %v786
  %v788 = vsel %vm785, %v787, %v783
  %v789 = vmul.f32 1.0, %v788
  %v790 = vsub.f32 %v723, %v748
  %v791 = vmul.f32 %v789, %v790
  %v792 = vadd.f32 %v748, %v791
  %v794 = vrot.slane %v792, 1
  %v795 = vrot.slane %v792, 2
  %v796 = vrot.slane %v792, 3
  %v797 = vrot.slane %v792, 4
  %v798 = vrot.slane %v792, 5
  %v799 = vrot.slane %v792, 6
  %v800 = vrot.slane %v792, 7
  %808 = vst [vmem:[%s7 + $0x7] sm:$0x1] %v792
  %809 = vst [vmem:[%s7 + $0xf] sm:$0x1] %v794
  %810 = vst [vmem:[%s7 + $0x17] sm:$0x1] %v795
  %811 = vst [vmem:[%s7 + $0x1f] sm:$0x1] %v796
  %812 = vst [vmem:[%s7 + $0x27] sm:$0x1] %v797
  %813 = vst [vmem:[%s7 + $0x2f] sm:$0x1] %v798
  %814 = vst [vmem:[%s7 + $0x37] sm:$0x1] %v799
  %815 = vst [vmem:[%s7 + $0x3f] sm:$0x1] %v800
  %816 = vst [vmem:[#allocation2] sm:$0xff] %v792
  // Predicated region
  $region53: #{minimal_rnn_forward.1} parent=0 // pred_check
    _
  $region54: #{minimal_rnn_forward.1} parent=0 // pred_check_branch
    %818 = sbr.rel (0) target = $region56
  $region55: #{minimal_rnn_forward.1} parent=0 // pred_region
    _
  $region56: #{minimal_rnn_forward.1} parent=0 // pred_fallthru
    _
  // Predicated region
  $region57: #{minimal_rnn_forward.1} parent=0 // pred_check
    _
  $region58: #{minimal_rnn_forward.1} parent=0 // pred_check_branch
    %820 = sbr.rel (0) target = $region60
  $region59: #{minimal_rnn_forward.1} parent=0 // pred_region
    _
  $region60: #{minimal_rnn_forward.1} parent=0 // pred_fallthru
    _
  %821 = vsyncmov [#allocation6]
  %s822 = vpop.sfrf %821
  %p823 = scmp.eq.s32.totalorder %s822, 0
  %p824 = pneg %p823
  %826 = shalt.err (%p824)

</llo_original>
